<compile_context>
chip_gen: v7x
topology: tpu7x:2x2x1
jax: 0.10.0
libtpu: 0.0.40
codegen_flags: <defaults>
</compile_context>

<pallas_src>
import jax
import jax.numpy as jnp
from jax import lax
from jax.experimental import pallas as pl
from jax.experimental.pallas import tpu as pltpu

# ---------------------------------------------------------------------------
# Model dimensions (small, consistent with --nhid / vocab of the LM module).
SEQ = 8      # bptt length
BATCH = 2    # batch size
NHID = 32    # hidden size
VSIZE = 256  # vocab size
N = SEQ * BATCH


# ---------------------------------------------------------------------------
# Pallas kernel: fused (NnLm MLP + dual projection + softmax ensemble + log),
# single block, no grid.
def ensemble_kernel(x_ref, w1_ref, b1_ref, wp_ref, bp_ref, out_ref):
    # x_ref : (N, 2H)  = [nn embedding rows | LSTM hidden rows]
    # w1_ref: (2H, 2H) = blockdiag(nn_w1, I);  b1_ref: (1, 2H) = [nn_b1 | 0]
    # wp_ref: (2H, 2V) = blockdiag(nn_wout, rnn_wout); bp_ref: (1, 2V)
    # out_ref: (N, V)  log mixture probabilities
    v = out_ref.shape[-1]

    # Stage 1: one MXU pass applies nn_w1 to the first H columns and identity
    # to the last H columns; selective tanh via a lane mask yields [h_nn|h_rnn].
    pre = jnp.dot(x_ref[...], w1_ref[...],
                  preferred_element_type=jnp.float32) + b1_ref[...]
    lane = lax.broadcasted_iota(jnp.int32, pre.shape, 1)
    h_cat = jnp.where(lane < NHID, jnp.tanh(pre), pre)          # (N, 2H)

    # Stage 2: single block-diagonal projection produces both logit sets.
    logits = jnp.dot(h_cat, wp_ref[...],
                     preferred_element_type=jnp.float32) + bp_ref[...]  # (N, 2V)
    logits_a = logits[:, :v]   # NnLm logits
    logits_b = logits[:, v:]   # LstmLm logits

    # Row-wise softmax (numerically stable, dim=-1 like F.softmax(x, dim=-1)),
    # using per-row reciprocal instead of a full-tensor divide.
    def _softmax(x):
        m = jnp.max(x, axis=-1, keepdims=True)
        e = jnp.exp(x - m)
        inv = pl.reciprocal(jnp.sum(e, axis=-1, keepdims=True), approx=False)
        return e * inv

    pa = _softmax(logits_a)
    pb = _softmax(logits_b)

    # ((pa + pb) / 2).log()
    out_ref[...] = jnp.log((pa + pb) * 0.5)


def ensemble_logprobs(x_cat, w1_big, b1_big, w_proj, b_proj):
    """x_cat: (N, 2H); w1_big: (2H,2H); b1_big: (1,2H); w_proj: (2H,2V);
    b_proj: (1,2V) -> (N, V) log mixture probabilities."""
    n = x_cat.shape[0]
    v = w_proj.shape[1] // 2
    vmem = lambda: pl.BlockSpec(memory_space=pltpu.MemorySpace.VMEM)
    return pl.pallas_call(
        ensemble_kernel,
        out_shape=jax.ShapeDtypeStruct((n, v), jnp.float32),
        in_specs=[vmem(), vmem(), vmem(), vmem(), vmem()],
        out_specs=vmem(),
    )(x_cat, w1_big, b1_big, w_proj, b_proj)


# ---------------------------------------------------------------------------
# Sub-model glue (parameter setup, embedding lookup, LSTM recurrence).
def init_params(key):
    ks = jax.random.split(key, 10)
    s = 0.1
    p = {
        # NnLm: embedding + tanh MLP hidden + projection (both fused in kernel)
        "nn_emb": jax.random.normal(ks[0], (VSIZE, NHID), jnp.float32) * s,
        "nn_w1": jax.random.normal(ks[1], (NHID, NHID), jnp.float32) * s,
        "nn_b1": jnp.zeros((NHID,), jnp.float32),
        "nn_wout": jax.random.normal(ks[2], (NHID, VSIZE), jnp.float32) * s,
        "nn_bout": jnp.zeros((1, VSIZE), jnp.float32),
        # LstmLm: embedding + single-layer LSTM + projection (in kernel)
        "rnn_emb": jax.random.normal(ks[3], (VSIZE, NHID), jnp.float32) * s,
        "lstm_wi": jax.random.normal(ks[4], (NHID, 4 * NHID), jnp.float32) * s,
        "lstm_wh": jax.random.normal(ks[5], (NHID, 4 * NHID), jnp.float32) * s,
        "lstm_b": jnp.zeros((4 * NHID,), jnp.float32),
        "rnn_wout": jax.random.normal(ks[6], (NHID, VSIZE), jnp.float32) * s,
        "rnn_bout": jnp.zeros((1, VSIZE), jnp.float32),
    }
    return p


def build_fused_weights(params):
    """Block-diagonal packing so the kernel does ONE MXU pass per stage."""
    H, V = NHID, VSIZE
    eye = jnp.eye(H, dtype=jnp.float32)
    zHH = jnp.zeros((H, H), jnp.float32)
    zHV = jnp.zeros((H, V), jnp.float32)
    w1_big = jnp.block([[params["nn_w1"], zHH], [zHH, eye]])             # (2H, 2H)
    b1_big = jnp.concatenate(
        [params["nn_b1"][None, :], jnp.zeros((1, H), jnp.float32)], axis=-1)  # (1, 2H)
    w_proj = jnp.block([[params["nn_wout"], zHV], [zHV, params["rnn_wout"]]])  # (2H, 2V)
    b_proj = jnp.concatenate([params["nn_bout"], params["rnn_bout"]], axis=-1) # (1, 2V)
    return w1_big, b1_big, w_proj, b_proj


def rnnlm_hidden(params, tokens, hid):
    # TODO(synk): LSTM recurrence is inherently sequential; kept in plain JAX
    # (lax.scan) — the per-step projection + ensemble softmax is the Pallas hot path.
    emb = jnp.take(params["rnn_emb"], tokens, axis=0)  # (S, B, H)
    if hid is None:
        h0 = jnp.zeros((BATCH, NHID), jnp.float32)
        c0 = jnp.zeros((BATCH, NHID), jnp.float32)
    else:
        h0, c0 = hid[0][0], hid[1][0]

    def step(carry, x_t):
        h, c = carry
        gates = x_t @ params["lstm_wi"] + h @ params["lstm_wh"] + params["lstm_b"]
        i_g, f_g, g_g, o_g = jnp.split(gates, 4, axis=-1)
        i_g = jax.nn.sigmoid(i_g)
        f_g = jax.nn.sigmoid(f_g)
        o_g = jax.nn.sigmoid(o_g)
        g_g = jnp.tanh(g_g)
        c_new = f_g * c + i_g * g_g
        h_new = o_g * jnp.tanh(c_new)
        return (h_new, c_new), h_new

    (h_t, c_t), hs = lax.scan(step, (h0, c0), emb)  # hs: (S, B, H)
    new_hid = (h_t[None], c_t[None])                 # (nlayers=1, B, H) each
    return hs, new_hid


def ensemble_forward(params, tokens, hid):
    """Ensemble.forward: returns (log-mixture probs (S, B, V), new hid)."""
    emb_nn = jnp.take(params["nn_emb"], tokens, axis=0)       # (S, B, H)
    h_rnn, new_hid = rnnlm_hidden(params, tokens, hid)        # (S, B, H)

    x_cat = jnp.concatenate(
        [emb_nn.reshape(N, NHID), h_rnn.reshape(N, NHID)], axis=-1)  # (N, 2H)
    w1_big, b1_big, w_proj, b_proj = build_fused_weights(params)

    out_flat = ensemble_logprobs(x_cat, w1_big, b1_big, w_proj, b_proj)
    return out_flat.reshape(SEQ, BATCH, VSIZE), new_hid


def ensemble_reference(params, tokens, hid):
    """Pure-JAX reference of Ensemble.forward for correctness checking."""
    emb_nn = jnp.take(params["nn_emb"], tokens, axis=0)
    h_nn = jnp.tanh(emb_nn @ params["nn_w1"] + params["nn_b1"])
    logits_a = h_nn @ params["nn_wout"] + params["nn_bout"]
    h_rnn, new_hid = rnnlm_hidden(params, tokens, hid)
    logits_b = h_rnn @ params["rnn_wout"] + params["rnn_bout"]
    pa = jax.nn.softmax(logits_a, axis=-1)
    pb = jax.nn.softmax(logits_b, axis=-1)
    return jnp.log((pa + pb) * 0.5), new_hid


# ---------------------------------------------------------------------------
if __name__ == "__main__":
    key = jax.random.PRNGKey(0)
    pkey, tkey = jax.random.split(key)
    params = init_params(pkey)
    tokens = jax.random.randint(tkey, (SEQ, BATCH), 0, VSIZE, dtype=jnp.int32)

    out, hid = ensemble_forward(params, tokens, None)
    out = jax.block_until_ready(out)
    hid = jax.block_until_ready(hid)

    # sanity: shapes, valid mixture distribution, and match vs. pure-JAX reference
    assert out.shape == (SEQ, BATCH, VSIZE)
    assert hid[0].shape == (1, BATCH, NHID) and hid[1].shape == (1, BATCH, NHID)
    row_sums = jnp.sum(jnp.exp(out), axis=-1)
    assert jnp.allclose(row_sums, 1.0, atol=1e-4), row_sums

    ref_out, _ = ensemble_reference(params, tokens, None)
    assert jnp.allclose(out, ref_out, atol=2e-3), float(jnp.max(jnp.abs(out - ref_out)))

    print("KERNEL_OK")
</pallas_src>

<mosaic_0001>
module attributes {stable_mosaic.version = 11 : i64} {
  func.func @ensemble_kernel(%arg0: memref<16x64xf32, #tpu.memory_space<vmem>>, %arg1: memref<64x64xf32, #tpu.memory_space<vmem>>, %arg2: memref<1x64xf32, #tpu.memory_space<vmem>>, %arg3: memref<64x512xf32, #tpu.memory_space<vmem>>, %arg4: memref<1x512xf32, #tpu.memory_space<vmem>>, %arg5: memref<16x256xf32, #tpu.memory_space<vmem>>) attributes {dimension_semantics = [], scalar_prefetch = 0 : i64, scratch_operands = 0 : i64, tpu.core_type = #tpu.core_type<tc>} {
    %c0 = arith.constant 0 : index
    %c0_0 = arith.constant 0 : index
    %0 = vector.load %arg0[%c0, %c0_0] : memref<16x64xf32, #tpu.memory_space<vmem>>, vector<16x64xf32>
    %c0_1 = arith.constant 0 : index
    %c0_2 = arith.constant 0 : index
    %1 = vector.load %arg1[%c0_1, %c0_2] : memref<64x64xf32, #tpu.memory_space<vmem>>, vector<64x64xf32>
    %cst = arith.constant dense<0.000000e+00> : vector<16x64xf32>
    %2 = tpu.matmul %0, %1, %cst {dimension_numbers = #tpu.dot_dimension_numbers<[1], [0], [0], [1], [0, 0, 1, 1], [], []>} : vector<16x64xf32>, vector<64x64xf32>, vector<16x64xf32> -> vector<16x64xf32>
    %c0_3 = arith.constant 0 : index
    %c0_4 = arith.constant 0 : index
    %3 = vector.load %arg2[%c0_3, %c0_4] : memref<1x64xf32, #tpu.memory_space<vmem>>, vector<1x64xf32>
    %4 = vector.broadcast %3 : vector<1x64xf32> to vector<16x64xf32>
    %5 = arith.addf %2, %4 : vector<16x64xf32>
    %6 = tpu.iota {dimensions = array<i32: 1>} : vector<16x64xi32>
    %c32_i32 = arith.constant 32 : i32
    %7 = vector.broadcast %c32_i32 : i32 to vector<16x64xi32>
    %8 = arith.cmpi slt, %6, %7 : vector<16x64xi32>
    %9 = math.tanh %5 : vector<16x64xf32>
    %10 = arith.select %8, %9, %5 : vector<16x64xi1>, vector<16x64xf32>
    %c0_5 = arith.constant 0 : index
    %c0_6 = arith.constant 0 : index
    %11 = vector.load %arg3[%c0_5, %c0_6] : memref<64x512xf32, #tpu.memory_space<vmem>>, vector<64x512xf32>
    %cst_7 = arith.constant dense<0.000000e+00> : vector<16x512xf32>
    %12 = tpu.matmul %10, %11, %cst_7 {dimension_numbers = #tpu.dot_dimension_numbers<[1], [0], [0], [1], [0, 0, 1, 1], [], []>} : vector<16x64xf32>, vector<64x512xf32>, vector<16x512xf32> -> vector<16x512xf32>
    %c0_8 = arith.constant 0 : index
    %c0_9 = arith.constant 0 : index
    %13 = vector.load %arg4[%c0_8, %c0_9] : memref<1x512xf32, #tpu.memory_space<vmem>>, vector<1x512xf32>
    %14 = vector.broadcast %13 : vector<1x512xf32> to vector<16x512xf32>
    %15 = arith.addf %12, %14 : vector<16x512xf32>
    %16 = vector.extract_strided_slice %15 {offsets = [0, 0], sizes = [16, 256], strides = [1, 1]} : vector<16x512xf32> to vector<16x256xf32>
    %17 = vector.extract_strided_slice %15 {offsets = [0, 256], sizes = [16, 256], strides = [1, 1]} : vector<16x512xf32> to vector<16x256xf32>
    %cst_10 = arith.constant dense<0xFF800000> : vector<16xf32>
    %18 = vector.multi_reduction <maximumf>, %16, %cst_10 [1] : vector<16x256xf32> to vector<16xf32>
    %19 = vector.shape_cast %18 : vector<16xf32> to vector<16x1xf32>
    %20 = vector.broadcast %19 : vector<16x1xf32> to vector<16x256xf32>
    %21 = arith.subf %16, %20 : vector<16x256xf32>
    %22 = math.exp %21 : vector<16x256xf32>
    %cst_11 = arith.constant dense<0.000000e+00> : vector<16xf32>
    %23 = vector.multi_reduction <add>, %22, %cst_11 [1] : vector<16x256xf32> to vector<16xf32>
    %24 = vector.shape_cast %23 : vector<16xf32> to vector<16x1xf32>
    %25 = tpu.reciprocal %24 : vector<16x1xf32> -> vector<16x1xf32>
    %26 = vector.broadcast %25 : vector<16x1xf32> to vector<16x256xf32>
    %27 = arith.mulf %22, %26 : vector<16x256xf32>
    %cst_12 = arith.constant dense<0xFF800000> : vector<16xf32>
    %28 = vector.multi_reduction <maximumf>, %17, %cst_12 [1] : vector<16x256xf32> to vector<16xf32>
    %29 = vector.shape_cast %28 : vector<16xf32> to vector<16x1xf32>
    %30 = vector.broadcast %29 : vector<16x1xf32> to vector<16x256xf32>
    %31 = arith.subf %17, %30 : vector<16x256xf32>
    %32 = math.exp %31 : vector<16x256xf32>
    %cst_13 = arith.constant dense<0.000000e+00> : vector<16xf32>
    %33 = vector.multi_reduction <add>, %32, %cst_13 [1] : vector<16x256xf32> to vector<16xf32>
    %34 = vector.shape_cast %33 : vector<16xf32> to vector<16x1xf32>
    %35 = tpu.reciprocal %34 : vector<16x1xf32> -> vector<16x1xf32>
    %36 = vector.broadcast %35 : vector<16x1xf32> to vector<16x256xf32>
    %37 = arith.mulf %32, %36 : vector<16x256xf32>
    %38 = arith.addf %27, %37 : vector<16x256xf32>
    %cst_14 = arith.constant 5.000000e-01 : f32
    %39 = vector.broadcast %cst_14 : f32 to vector<16x256xf32>
    %40 = arith.mulf %38, %39 : vector<16x256xf32>
    %41 = math.log %40 : vector<16x256xf32>
    %c0_15 = arith.constant 0 : index
    %c0_16 = arith.constant 0 : index
    %42 = vector.load %arg5[%c0_15, %c0_16] : memref<16x256xf32, #tpu.memory_space<vmem>>, vector<16x256xf32>
    tpu.vector_store %arg5[%c0_15, %c0_16], %41 {strides = array<i32>} : memref<16x256xf32, #tpu.memory_space<vmem>>, vector<16x256xf32>,
    return
  }
}

</mosaic_0001>

<llo_original>
// kernel: tpu_custom_call.1
$region0: #{tpu_custom_call.1}
  #allocation0 [shape = 'u32[]', space=smem, size = 0x4, offset = 0x4, fixed_abs, tag = 'smem constant byte address 0x4 - core index']
  #allocation1 [shape = 'u32[144,128]{1,0:T(1,128)}', space=vmem, size = 0x12000, scoped, tag = 'internal scratch']
  %s0 = inlined_call_operand.hbm [shape: f32[16,64], index: 0, kind: input, shape index: {}]
  %s1 = inlined_call_operand.hbm [shape: f32[64,64], index: 1, kind: input, shape index: {}]
  %s2 = inlined_call_operand.vmem [shape: f32[1,64], index: 2, kind: input, shape index: {}]
  %s3 = inlined_call_operand.hbm [shape: f32[64,512], index: 3, kind: input, shape index: {}]
  %s4 = inlined_call_operand.vmem [shape: f32[1,512], index: 4, kind: input, shape index: {}]
  %s5 = inlined_call_operand.hbm [shape: f32[16,256], index: 5, kind: output, shape index: {}]
  %s6 = sld [smem:[#allocation0]]
  $region42: #{tpu_custom_call.1} parent=0
    _
  %s8 = ssub.s32 1, %s6
  %s9 = scalar_select 0, %s8, %s6
  $region1: #{tpu_custom_call.1} parent=0
    #allocation2 [shape = 'u8[8192]{0}', space=vmem, size = 0x2000, scoped, tag = 'input window, operand 0, single buffered']
    #allocation3 [shape = 's32[1]{0}', space=sflag, size = 0x4, scoped, tag = 'scoped memory for tpu_custom_call.1']
    #allocation4 [shape = 's32[1]{0}', space=sflag, size = 0x4, scoped, tag = 'scoped memory for tpu_custom_call.1']
    #allocation5 [shape = 'u8[32768]{0}', space=vmem, size = 0x8000, scoped, tag = 'input window, operand 1, single buffered']
    #allocation6 [shape = 's32[1]{0}', space=sflag, size = 0x4, scoped, tag = 'scoped memory for tpu_custom_call.1']
    #allocation7 [shape = 'u8[131072]{0}', space=vmem, size = 0x20000, scoped, tag = 'input window, operand 3, single buffered']
    #allocation8 [shape = 'u8[16384]{0}', space=vmem, size = 0x4000, scoped, tag = 'output window, operand 0, single buffered']
    %10 = vsyncpa [#allocation3], 0
    %11 = vsyncpa [#allocation6], 0
    %12 = vsyncpa [#allocation4], 0
    // Predicated region
    $region2: #{tpu_custom_call.1} parent=1 // pred_check
      _
    $region3: #{tpu_custom_call.1} parent=1 // pred_check_branch
      %14 = sbr.rel (0) target = $region5
    $region4: #{tpu_custom_call.1} parent=1 // pred_region
      %s16 = ssub.s32 256, 256
      %17 = vsyncadd [#allocation3], %s16
      %s18 = sshll.u32 [#allocation2], 4
      %s19 = int_to_ptr.vmem [resolvable:$true] %s18
      %24 = dma.hbm_to_vmem [thread:$0]  %s0, 256, %s19, [#allocation3], 128, 128, 8
    $region5: #{tpu_custom_call.1} parent=1 // pred_fallthru
      _
    // Predicated region
    $region6: #{tpu_custom_call.1} parent=1 // pred_check
      _
    $region7: #{tpu_custom_call.1} parent=1 // pred_check_branch
      %26 = sbr.rel (0) target = $region9
    $region8: #{tpu_custom_call.1} parent=1 // pred_region
      %s28 = ssub.s32 1024, 1024
      %29 = vsyncadd [#allocation6], %s28
      %s30 = sshll.u32 [#allocation5], 4
      %s31 = int_to_ptr.vmem [resolvable:$true] %s30
      %36 = dma.hbm_to_vmem [thread:$0]  %s1, 1024, %s31, [#allocation6], 128, 128, 8
    $region9: #{tpu_custom_call.1} parent=1 // pred_fallthru
      _
    // Predicated region
    $region10: #{tpu_custom_call.1} parent=1 // pred_check
      _
    $region11: #{tpu_custom_call.1} parent=1 // pred_check_branch
      %38 = sbr.rel (0) target = $region13
    $region12: #{tpu_custom_call.1} parent=1 // pred_region
      _
    $region13: #{tpu_custom_call.1} parent=1 // pred_fallthru
      _
    // Predicated region
    $region14: #{tpu_custom_call.1} parent=1 // pred_check
      _
    $region15: #{tpu_custom_call.1} parent=1 // pred_check_branch
      %40 = sbr.rel (0) target = $region17
    $region16: #{tpu_custom_call.1} parent=1 // pred_region
      %s42 = ssub.s32 4096, 4096
      %43 = vsyncadd [#allocation6], %s42
      %s44 = sshll.u32 [#allocation7], 4
      %s45 = int_to_ptr.vmem [resolvable:$true] %s44
      %50 = dma.hbm_to_vmem [thread:$0]  %s3, 4096, %s45, [#allocation6], 512, 512, 32
    $region17: #{tpu_custom_call.1} parent=1 // pred_fallthru
      _
    // Predicated region
    $region18: #{tpu_custom_call.1} parent=1 // pred_check
      _
    $region19: #{tpu_custom_call.1} parent=1 // pred_check_branch
      %52 = sbr.rel (0) target = $region21
    $region20: #{tpu_custom_call.1} parent=1 // pred_region
      _
    $region21: #{tpu_custom_call.1} parent=1 // pred_fallthru
      _
    // Predicated region
    $region22: #{tpu_custom_call.1} parent=1 // pred_check
      _
    $region23: #{tpu_custom_call.1} parent=1 // pred_check_branch
      %54 = sbr.rel (0) target = $region25
    $region24: #{tpu_custom_call.1} parent=1 // pred_region
      %55 = dma.done [#allocation3], 256
    $region25: #{tpu_custom_call.1} parent=1 // pred_fallthru
      _
    // Predicated region
    $region26: #{tpu_custom_call.1} parent=1 // pred_check
      _
    $region27: #{tpu_custom_call.1} parent=1 // pred_check_branch
      %57 = sbr.rel (0) target = $region29
    $region28: #{tpu_custom_call.1} parent=1 // pred_region
      %58 = dma.done [#allocation6], 1024
    $region29: #{tpu_custom_call.1} parent=1 // pred_fallthru
      _
    // Predicated region
    $region30: #{tpu_custom_call.1} parent=1 // pred_check
      _
    $region31: #{tpu_custom_call.1} parent=1 // pred_check_branch
      %60 = sbr.rel (0) target = $region33
    $region32: #{tpu_custom_call.1} parent=1 // pred_region
      %61 = dma.done [#allocation6], 4096
    $region33: #{tpu_custom_call.1} parent=1 // pred_fallthru
      _
    %v62 = vld [vmem:[#allocation2] sm:$0xff]
    %v63 = vld [vmem:[#allocation2 + $0x8] sm:$0xff]
    %v64 = vld [vmem:[#allocation5] sm:$0xff]
    %v65 = vld [vmem:[#allocation5 + $0x8] sm:$0xff]
    %v66 = vld [vmem:[#allocation5 + $0x10] sm:$0xff]
    %v67 = vld [vmem:[#allocation5 + $0x18] sm:$0xff]
    %v68 = vld [vmem:[#allocation5 + $0x20] sm:$0xff]
    %v69 = vld [vmem:[#allocation5 + $0x28] sm:$0xff]
    %v70 = vld [vmem:[#allocation5 + $0x30] sm:$0xff]
    %v71 = vld [vmem:[#allocation5 + $0x38] sm:$0xff]
    %v72 = vld [vmem:[%s2] sm:$0x1]
    %v74 = vlaneseq
    %v75 = vshrl.u32 %v74, 7
    %v76 = vsub.s32 0, %v75
    %v77 = vrot.slane %v72, %v76
    %vm79 = vcmask 523264
    %v81 = vsel %vm79, %v62, 0
    %v84 = vsel %vm79, %v63, 0
    %86 = vmatprep.subr.mxu0 0.0
    %87 = vmatpush1.msra.mxu0 %v64
    %88 = vmatprep.subr.mxu0 0.0
    %89 = vmatpush1.msra.mxu0 %v65
    %90 = vmatprep.subr.mxu0 0.0
    %91 = vmatpush1.msra.mxu0 %v66
    %92 = vmatprep.subr.mxu0 0.0
    %93 = vmatpush1.msra.mxu0 %v67
    %94 = vmatprep.subr.mxu0 0.0
    %95 = vmatpush1.msra.mxu0 %v68
    %96 = vmatprep.subr.mxu0 0.0
    %97 = vmatpush1.msra.mxu0 %v69
    %98 = vmatprep.subr.mxu0 0.0
    %99 = vmatpush1.msra.mxu0 %v70
    %100 = vmatprep.subr.mxu0 0.0
    %101 = vmatpush1.msra.mxu0 %v71
    %102 = vmatprep.subr.mxu0 0.0
    %103 = vmatpush1.msra.mxu0 0.0
    %104 = vmatprep.subr.mxu0 0.0
    %105 = vmatpush1.msra.mxu0 0.0
    %106 = vmatprep.subr.mxu0 0.0
    %107 = vmatpush1.msra.mxu0 0.0
    %108 = vmatprep.subr.mxu0 0.0
    %109 = vmatpush1.msra.mxu0 0.0
    %110 = vmatprep.subr.mxu0 0.0
    %111 = vmatpush1.msra.mxu0 0.0
    %112 = vmatprep.subr.mxu0 0.0
    %113 = vmatpush1.msra.mxu0 0.0
    %114 = vmatprep.subr.mxu0 0.0
    %115 = vmatpush1.msra.mxu0 0.0
    %116 = vmatprep.subr.mxu0 0.0
    %117 = vmatpush1.msra.mxu0 0.0
    %118 = vmatprep.subr.mxu0 0.0
    %119 = vmatpush1.msra.mxu0 0.0
    %120 = vmatprep.subr.mxu0 0.0
    %121 = vmatpush1.msra.mxu0 0.0
    %122 = vmatprep.subr.mxu0 0.0
    %123 = vmatpush1.msra.mxu0 0.0
    %124 = vmatprep.subr.mxu0 0.0
    %125 = vmatpush1.msra.mxu0 0.0
    %126 = vmatprep.subr.mxu0 0.0
    %127 = vmatpush1.msra.mxu0 0.0
    %128 = vmatprep.subr.mxu0 0.0
    %129 = vmatpush1.msra.mxu0 0.0
    %130 = vmatprep.subr.mxu0 0.0
    %131 = vmatpush1.msra.mxu0 0.0
    %132 = vmatprep.subr.mxu0 0.0
    %133 = vmatpush1.msra.mxu0 0.0
    %134 = vmatprep.subr.mxu0 0.0
    %135 = vmatpush1.msra.mxu0 0.0
    %136 = vmatprep.subr.mxu0 0.0
    %137 = vmatpush1.msra.mxu0 0.0
    %138 = vmatprep.subr.mxu0 0.0
    %139 = vmatpush1.msra.mxu0 0.0
    %140 = vmatprep.subr.mxu0 0.0
    %141 = vmatpush1.msra.mxu0 0.0
    %142 = vmatprep.subr.mxu0 0.0
    %143 = vmatpush1.msra.mxu0 0.0
    %144 = vmatprep.subr.mxu0 0.0
    %145 = vmatpush1.msra.mxu0 0.0
    %146 = vmatprep.subr.mxu0 0.0
    %147 = vmatpush1.msra.mxu0 0.0
    %148 = vmatprep.subr.mxu0 0.0
    %149 = vmatpush1.msra.mxu0 0.0
    %150 = vmatprep.mubr.f32.mxu0 0.0
    %151 = vmatmul.mubr.f32.gmra.mrb[0].mxu0 %v81
    %v152 = vpop.f32.mrb[0].mxu0
    %v153 = vadd.f32 %v77, %v152
    %v154 = vpop.f32.mrb[0].mxu0
    %155 = vmatprep.mubr.f32.mxu0 0.0
    %156 = vmatmul.mubr.f32.gmra.mrb[0].mxu0 %v84
    %v157 = vpop.f32.mrb[0].mxu0
    %v158 = vadd.f32 %v77, %v157
    %v159 = vpop.f32.mrb[0].mxu0
    %160 = vdwg.mxu0
    %v161 = vlaneseq
    %v162 = vand.u32 %v161, 127
    %vm163 = vcmp.lt.s32.totalorder %v162, 32
    %v164 = vtanh.pop %v153
    %v165 = vtanh.pop %v158
    %v166 = vsel %vm163, %v164, %v153
    %v167 = vsel %vm163, %v165, %v158
    %v168 = vld [vmem:[#allocation7] sm:$0xff]
    %v169 = vld [vmem:[#allocation7 + $0x8] sm:$0xff]
    %v170 = vld [vmem:[#allocation7 + $0x10] sm:$0xff]
    %v171 = vld [vmem:[#allocation7 + $0x18] sm:$0xff]
    %v172 = vld [vmem:[#allocation7 + $0x20] sm:$0xff]
    %v173 = vld [vmem:[#allocation7 + $0x28] sm:$0xff]
    %v174 = vld [vmem:[#allocation7 + $0x30] sm:$0xff]
    %v175 = vld [vmem:[#allocation7 + $0x38] sm:$0xff]
    %v176 = vld [vmem:[#allocation7 + $0x40] sm:$0xff]
    %v177 = vld [vmem:[#allocation7 + $0x48] sm:$0xff]
    %v178 = vld [vmem:[#allocation7 + $0x50] sm:$0xff]
    %v179 = vld [vmem:[#allocation7 + $0x58] sm:$0xff]
    %v180 = vld [vmem:[#allocation7 + $0x60] sm:$0xff]
    %v181 = vld [vmem:[#allocation7 + $0x68] sm:$0xff]
    %v182 = vld [vmem:[#allocation7 + $0x70] sm:$0xff]
    %v183 = vld [vmem:[#allocation7 + $0x78] sm:$0xff]
    %v184 = vld [vmem:[#allocation7 + $0x80] sm:$0xff]
    %v185 = vld [vmem:[#allocation7 + $0x88] sm:$0xff]
    %v186 = vld [vmem:[#allocation7 + $0x90] sm:$0xff]
    %v187 = vld [vmem:[#allocation7 + $0x98] sm:$0xff]
    %v188 = vld [vmem:[#allocation7 + $0xa0] sm:$0xff]
    %v189 = vld [vmem:[#allocation7 + $0xa8] sm:$0xff]
    %v190 = vld [vmem:[#allocation7 + $0xb0] sm:$0xff]
    %v191 = vld [vmem:[#allocation7 + $0xb8] sm:$0xff]
    %v192 = vld [vmem:[#allocation7 + $0xc0] sm:$0xff]
    %v193 = vld [vmem:[#allocation7 + $0xc8] sm:$0xff]
    %v194 = vld [vmem:[#allocation7 + $0xd0] sm:$0xff]
    %v195 = vld [vmem:[#allocation7 + $0xd8] sm:$0xff]
    %v196 = vld [vmem:[#allocation7 + $0xe0] sm:$0xff]
    %v197 = vld [vmem:[#allocation7 + $0xe8] sm:$0xff]
    %v198 = vld [vmem:[#allocation7 + $0xf0] sm:$0xff]
    %v199 = vld [vmem:[#allocation7 + $0xf8] sm:$0xff]
    %v200 = vld [vmem:[%s4] sm:$0xf]
    %v202 = vlaneseq
    %v203 = vshrl.u32 %v202, 7
    %v204 = vsub.s32 0, %v203
    %v205 = vrot.slane %v200, %v204
    %v206 = vlaneseq
    %v207 = vshrl.u32 %v206, 7
    %v208 = vsub.s32 1, %v207
    %v209 = vrot.slane %v200, %v208
    %v210 = vlaneseq
    %v211 = vshrl.u32 %v210, 7
    %v212 = vsub.s32 2, %v211
    %v213 = vrot.slane %v200, %v212
    %v214 = vlaneseq
    %v215 = vshrl.u32 %v214, 7
    %v216 = vsub.s32 3, %v215
    %v217 = vrot.slane %v200, %v216
    %v223 = vsel %vm79, %v166, 0
    %v226 = vsel %vm79, %v167, 0
    %228 = vmatprep.subr.mxu0 %v169
    %229 = vmatpush1.msra.mxu0 %v168
    %230 = vmatprep.subr.mxu0 %v173
    %231 = vmatpush1.msra.mxu0 %v172
    %232 = vmatprep.subr.mxu0 %v177
    %233 = vmatpush1.msra.mxu0 %v176
    %234 = vmatprep.subr.mxu0 %v181
    %235 = vmatpush1.msra.mxu0 %v180
    %236 = vmatprep.subr.mxu0 %v185
    %237 = vmatpush1.msra.mxu0 %v184
    %238 = vmatprep.subr.mxu0 %v189
    %239 = vmatpush1.msra.mxu0 %v188
    %240 = vmatprep.subr.mxu0 %v193
    %241 = vmatpush1.msra.mxu0 %v192
    %242 = vmatprep.subr.mxu0 %v197
    %243 = vmatpush1.msra.mxu0 %v196
    %244 = vmatprep.subr.mxu0 0.0
    %245 = vmatpush1.msra.mxu0 0.0
    %246 = vmatprep.subr.mxu0 0.0
    %247 = vmatpush1.msra.mxu0 0.0
    %248 = vmatprep.subr.mxu0 0.0
    %249 = vmatpush1.msra.mxu0 0.0
    %250 = vmatprep.subr.mxu0 0.0
    %251 = vmatpush1.msra.mxu0 0.0
    %252 = vmatprep.subr.mxu0 0.0
    %253 = vmatpush1.msra.mxu0 0.0
    %254 = vmatprep.subr.mxu0 0.0
    %255 = vmatpush1.msra.mxu0 0.0
    %256 = vmatprep.subr.mxu0 0.0
    %257 = vmatpush1.msra.mxu0 0.0
    %258 = vmatprep.subr.mxu0 0.0
    %259 = vmatpush1.msra.mxu0 0.0
    %260 = vmatprep.subr.mxu0 0.0
    %261 = vmatpush1.msra.mxu0 0.0
    %262 = vmatprep.subr.mxu0 0.0
    %263 = vmatpush1.msra.mxu0 0.0
    %264 = vmatprep.subr.mxu0 0.0
    %265 = vmatpush1.msra.mxu0 0.0
    %266 = vmatprep.subr.mxu0 0.0
    %267 = vmatpush1.msra.mxu0 0.0
    %268 = vmatprep.subr.mxu0 0.0
    %269 = vmatpush1.msra.mxu0 0.0
    %270 = vmatprep.subr.mxu0 0.0
    %271 = vmatpush1.msra.mxu0 0.0
    %272 = vmatprep.subr.mxu0 0.0
    %273 = vmatpush1.msra.mxu0 0.0
    %274 = vmatprep.subr.mxu0 0.0
    %275 = vmatpush1.msra.mxu0 0.0
    %276 = vmatprep.subr.mxu0 0.0
    %277 = vmatpush1.msra.mxu0 0.0
    %278 = vmatprep.subr.mxu0 0.0
    %279 = vmatpush1.msra.mxu0 0.0
    %280 = vmatprep.subr.mxu0 0.0
    %281 = vmatpush1.msra.mxu0 0.0
    %282 = vmatprep.subr.mxu0 0.0
    %283 = vmatpush1.msra.mxu0 0.0
    %284 = vmatprep.subr.mxu0 0.0
    %285 = vmatpush1.msra.mxu0 0.0
    %286 = vmatprep.subr.mxu0 0.0
    %287 = vmatpush1.msra.mxu0 0.0
    %288 = vmatprep.subr.mxu0 0.0
    %289 = vmatpush1.msra.mxu0 0.0
    %290 = vmatprep.subr.mxu0 0.0
    %291 = vmatpush1.msra.mxu0 0.0
    %292 = vmatprep.mubr.f32.mxu0 0.0
    %293 = vmatmul.mubr.f32.gmra.mrb[0].mxu0 %v223
    %v294 = vpop.f32.mrb[0].mxu0
    %v295 = vadd.f32 %v205, %v294
    %v296 = vpop.f32.mrb[0].mxu0
    %v297 = vadd.f32 %v209, %v296
    %298 = vmatprep.mubr.f32.mxu0 0.0
    %299 = vmatmul.mubr.f32.gmra.mrb[0].mxu0 %v226
    %v300 = vpop.f32.mrb[0].mxu0
    %v301 = vadd.f32 %v205, %v300
    %v302 = vpop.f32.mrb[0].mxu0
    %v303 = vadd.f32 %v209, %v302
    %304 = vdwg.mxu0
    %305 = vmatprep.subr.mxu0 %v171
    %306 = vmatpush1.msra.mxu0 %v170
    %307 = vmatprep.subr.mxu0 %v175
    %308 = vmatpush1.msra.mxu0 %v174
    %309 = vmatprep.subr.mxu0 %v179
    %310 = vmatpush1.msra.mxu0 %v178
    %311 = vmatprep.subr.mxu0 %v183
    %312 = vmatpush1.msra.mxu0 %v182
    %313 = vmatprep.subr.mxu0 %v187
    %314 = vmatpush1.msra.mxu0 %v186
    %315 = vmatprep.subr.mxu0 %v191
    %316 = vmatpush1.msra.mxu0 %v190
    %317 = vmatprep.subr.mxu0 %v195
    %318 = vmatpush1.msra.mxu0 %v194
    %319 = vmatprep.subr.mxu0 %v199
    %320 = vmatpush1.msra.mxu0 %v198
    %321 = vmatprep.subr.mxu0 0.0
    %322 = vmatpush1.msra.mxu0 0.0
    %323 = vmatprep.subr.mxu0 0.0
    %324 = vmatpush1.msra.mxu0 0.0
    %325 = vmatprep.subr.mxu0 0.0
    %326 = vmatpush1.msra.mxu0 0.0
    %327 = vmatprep.subr.mxu0 0.0
    %328 = vmatpush1.msra.mxu0 0.0
    %329 = vmatprep.subr.mxu0 0.0
    %330 = vmatpush1.msra.mxu0 0.0
    %331 = vmatprep.subr.mxu0 0.0
    %332 = vmatpush1.msra.mxu0 0.0
    %333 = vmatprep.subr.mxu0 0.0
    %334 = vmatpush1.msra.mxu0 0.0
    %335 = vmatprep.subr.mxu0 0.0
    %336 = vmatpush1.msra.mxu0 0.0
    %337 = vmatprep.subr.mxu0 0.0
    %338 = vmatpush1.msra.mxu0 0.0
    %339 = vmatprep.subr.mxu0 0.0
    %340 = vmatpush1.msra.mxu0 0.0
    %341 = vmatprep.subr.mxu0 0.0
    %342 = vmatpush1.msra.mxu0 0.0
    %343 = vmatprep.subr.mxu0 0.0
    %344 = vmatpush1.msra.mxu0 0.0
    %345 = vmatprep.subr.mxu0 0.0
    %346 = vmatpush1.msra.mxu0 0.0
    %347 = vmatprep.subr.mxu0 0.0
    %348 = vmatpush1.msra.mxu0 0.0
    %349 = vmatprep.subr.mxu0 0.0
    %350 = vmatpush1.msra.mxu0 0.0
    %351 = vmatprep.subr.mxu0 0.0
    %352 = vmatpush1.msra.mxu0 0.0
    %353 = vmatprep.subr.mxu0 0.0
    %354 = vmatpush1.msra.mxu0 0.0
    %355 = vmatprep.subr.mxu0 0.0
    %356 = vmatpush1.msra.mxu0 0.0
    %357 = vmatprep.subr.mxu0 0.0
    %358 = vmatpush1.msra.mxu0 0.0
    %359 = vmatprep.subr.mxu0 0.0
    %360 = vmatpush1.msra.mxu0 0.0
    %361 = vmatprep.subr.mxu0 0.0
    %362 = vmatpush1.msra.mxu0 0.0
    %363 = vmatprep.subr.mxu0 0.0
    %364 = vmatpush1.msra.mxu0 0.0
    %365 = vmatprep.subr.mxu0 0.0
    %366 = vmatpush1.msra.mxu0 0.0
    %367 = vmatprep.subr.mxu0 0.0
    %368 = vmatpush1.msra.mxu0 0.0
    %369 = vmatprep.mubr.f32.mxu0 0.0
    %370 = vmatmul.mubr.f32.gmra.mrb[0].mxu0 %v223
    %v371 = vpop.f32.mrb[0].mxu0
    %v372 = vadd.f32 %v213, %v371
    %v373 = vpop.f32.mrb[0].mxu0
    %v374 = vadd.f32 %v217, %v373
    %375 = vmatprep.mubr.f32.mxu0 0.0
    %376 = vmatmul.mubr.f32.gmra.mrb[0].mxu0 %v226
    %v377 = vpop.f32.mrb[0].mxu0
    %v378 = vadd.f32 %v213, %v377
    %v379 = vpop.f32.mrb[0].mxu0
    %v380 = vadd.f32 %v217, %v379
    %381 = vdwg.mxu0
    %v382 = vmax.f32 %v295, %v297
    %383 = vmax.xlane.f32.xlu0 %v382
    %v384 = vpop.xlane.xlu0 %383
    %v385 = vmax.f32 %v301, %v303
    %386 = vmax.xlane.f32.xlu0 %v385
    %v387 = vpop.xlane.xlu0 %386
    %v388 = vsub.f32 %v295, %v384
    %v389 = vsub.f32 %v297, %v384
    %v390 = vsub.f32 %v301, %v387
    %v391 = vsub.f32 %v303, %v387
    %v392 = vmul.f32 %v388, 1.442695
    %v393 = vpow.pop %v392
    %v394 = vmul.f32 %v389, 1.442695
    %v395 = vpow.pop %v394
    %v396 = vmul.f32 %v390, 1.442695
    %v397 = vpow.pop %v396
    %v398 = vmul.f32 %v391, 1.442695
    %v399 = vpow.pop %v398
    %v400 = vadd.f32 %v393, %v395
    %401 = vadd.xlane.f32.xlu0 %v400
    %v402 = vpop.xlane.xlu0 %401
    %v403 = vadd.f32 %v397, %v399
    %404 = vadd.xlane.f32.xlu0 %v403
    %v405 = vpop.xlane.xlu0 %404
    %v406 = vrcp.pop %v402
    %v407 = vrcp.pop %v405
    %v408 = vmul.f32 %v393, %v406
    %v409 = vmul.f32 %v395, %v406
    %v410 = vmul.f32 %v397, %v407
    %v411 = vmul.f32 %v399, %v407
    %v412 = vmax.f32 %v372, %v374
    %413 = vmax.xlane.f32.xlu0 %v412
    %v414 = vpop.xlane.xlu0 %413
    %v415 = vmax.f32 %v378, %v380
    %416 = vmax.xlane.f32.xlu0 %v415
    %v417 = vpop.xlane.xlu0 %416
    %v418 = vsub.f32 %v372, %v414
    %v419 = vsub.f32 %v374, %v414
    %v420 = vsub.f32 %v378, %v417
    %v421 = vsub.f32 %v380, %v417
    %v422 = vmul.f32 %v418, 1.442695
    %v423 = vpow.pop %v422
    %v424 = vmul.f32 %v419, 1.442695
    %v425 = vpow.pop %v424
    %v426 = vmul.f32 %v420, 1.442695
    %v427 = vpow.pop %v426
    %v428 = vmul.f32 %v421, 1.442695
    %v429 = vpow.pop %v428
    %v430 = vadd.f32 %v423, %v425
    %431 = vadd.xlane.f32.xlu0 %v430
    %v432 = vpop.xlane.xlu0 %431
    %v433 = vadd.f32 %v427, %v429
    %434 = vadd.xlane.f32.xlu0 %v433
    %v435 = vpop.xlane.xlu0 %434
    %v436 = vrcp.pop %v432
    %v437 = vrcp.pop %v435
    %v438 = vmul.f32 %v423, %v436
    %v439 = vmul.f32 %v425, %v436
    %v440 = vmul.f32 %v427, %v437
    %v441 = vmul.f32 %v429, %v437
    %v442 = vadd.f32 %v408, %v438
    %v443 = vadd.f32 %v409, %v439
    %v444 = vadd.f32 %v410, %v440
    %v445 = vadd.f32 %v411, %v441
    %v446 = vmul.f32 %v442, 0.5
    %v447 = vmul.f32 %v443, 0.5
    %v448 = vmul.f32 %v444, 0.5
    %v449 = vmul.f32 %v445, 0.5
    %v450 = vlog2.pop %v446
    %v451 = vmul.f32 %v450, 0.6931472
    %v452 = vlog2.pop %v447
    %v453 = vmul.f32 %v452, 0.6931472
    %v454 = vlog2.pop %v448
    %v455 = vmul.f32 %v454, 0.6931472
    %v456 = vlog2.pop %v449
    %v457 = vmul.f32 %v456, 0.6931472
    %458 = vst [vmem:[#allocation8] sm:$0xff] %v451
    %459 = vst [vmem:[#allocation8 + $0x8] sm:$0xff] %v453
    %460 = vst [vmem:[#allocation8 + $0x10] sm:$0xff] %v455
    %461 = vst [vmem:[#allocation8 + $0x18] sm:$0xff] %v457
    // Predicated region
    $region34: #{tpu_custom_call.1} parent=1 // pred_check
      _
    $region35: #{tpu_custom_call.1} parent=1 // pred_check_branch
      %463 = sbr.rel (0) target = $region37
    $region36: #{tpu_custom_call.1} parent=1 // pred_region
      %s465 = ssub.s32 512, 512
      %466 = vsyncadd [#allocation4], %s465
      %s467 = sshll.u32 [#allocation8], 4
      %s468 = int_to_ptr.vmem [resolvable:$true] %s467
      %473 = dma.vmem_to_hbm [thread:$0]  %s468, 512, %s5, [#allocation4], 256, 256, 16
    $region37: #{tpu_custom_call.1} parent=1 // pred_fallthru
      _
    // Predicated region
    $region38: #{tpu_custom_call.1} parent=1 // pred_check
      _
    $region39: #{tpu_custom_call.1} parent=1 // pred_check_branch
      %475 = sbr.rel (0) target = $region41
    $region40: #{tpu_custom_call.1} parent=1 // pred_region
      %476 = dma.done [#allocation4], 512
    $region41: #{tpu_custom_call.1} parent=1 // pred_fallthru
      _
    %477 = vsyncpa [#allocation3], 1
    %478 = vsyncpa [#allocation6], 1
    %479 = vsyncpa [#allocation4], 1

</llo_original>
